<compile_context>
chip_gen: v6e
topology: v6e:2x2x1
jax: 0.10.0
libtpu: 0.0.40
codegen_flags: <defaults>
</compile_context>

<pallas_src>
import jax
import jax.numpy as jnp
from jax import lax
from jax.experimental import pallas as pl
from jax.experimental.pallas import tpu as pltpu


def _attention_fusion4_kernel(a_ref, b_ref, o_ref):
    # a_ref, b_ref, o_ref: (TB, D) tiles in VMEM.
    a = a_ref[...].astype(jnp.float32)
    b = b_ref[...].astype(jnp.float32)

    # Per-row cosine pieces (VPU multiplies + XLU lane reductions, no MXU).
    dot = jnp.sum(a * b, axis=-1, keepdims=True)          # (TB, 1)
    na2 = jnp.sum(a * a, axis=-1, keepdims=True)          # (TB, 1)
    nb2 = jnp.sum(b * b, axis=-1, keepdims=True)          # (TB, 1)

    # w = 1 - dot / max(||a||*||b||, 1e-8).  sqrt is monotone, so the clamp
    # commutes: one EUP rsqrt replaces 2 sqrt + 1 divide.
    w = 1.0 - dot * lax.rsqrt(jnp.maximum(na2 * nb2, 1e-16))   # (TB, 1)

    # merged = (w * A + (2 - w) * B) / 2, broadcast over the feature dim.
    o_ref[...] = (0.5 * (w * a + (2.0 - w) * b)).astype(o_ref.dtype)


def _round_up(x, m):
    return ((x + m - 1) // m) * m


def _pick_tile_b(batch, feat, itemsize):
    """Batch tile (multiple of 8): as large as the VMEM budget allows, but
    small enough to keep >= ~4 grid steps (pipeline overlap + v7x megacore)."""
    budget = 16 * 1024 * 1024                  # tile buffers; safe on v5e/v6e/v7x
    per_row = 6 * feat * int(itemsize)         # (A, B, out) x double buffer, input dtype
    t = max(8, (budget // max(per_row, 1)) // 8 * 8)
    t = min(t, 1024)
    # Keep at least ~4 grid steps when the batch allows it.
    min_steps = 4
    t = min(t, max(8, _round_up(pl.cdiv(_round_up(batch, 8), min_steps), 8)))
    return int(t)


@jax.jit
def attention_fusion4(feature_a, feature_b):
    """Pallas implementation of AttentionFusion4.forward.

    feature_a, feature_b: (B, D)
    returns merged_vector: (B, D)
    """
    B, D = feature_a.shape
    assert feature_b.shape == (B, D)

    orig_D = D
    if D % 128 != 0:
        # Lane-dense stores: zero-pad the feature dim (zeros don't change the
        # dot or the norms); padded columns are sliced back off at the end.
        D = _round_up(D, 128)
        pad = ((0, 0), (0, D - orig_D))
        feature_a = jnp.pad(feature_a, pad)
        feature_b = jnp.pad(feature_b, pad)

    itemsize = feature_a.dtype.itemsize
    tile_b = _pick_tile_b(B, D, itemsize)
    grid = (pl.cdiv(B, tile_b),)               # ragged last block: no batch pad/slice

    # Explicit VMEM limit: >= 32 MiB (v5e scoped default is 16 MiB), but never
    # above 48 MiB so v7x's 64 MiB VMEM keeps headroom.
    tile_bytes = 6 * tile_b * D * itemsize
    vmem_limit = min(max(32 * 1024 * 1024, int(tile_bytes * 3 // 2)),
                     48 * 1024 * 1024)
    # TODO(synk): for D so large that even an 8-row tile exceeds ~48 MiB,
    #             tile the feature dim with a two-pass reduction.

    out = pl.pallas_call(
        _attention_fusion4_kernel,
        out_shape=jax.ShapeDtypeStruct((B, D), feature_a.dtype),
        grid_spec=pltpu.PrefetchScalarGridSpec(
            num_scalar_prefetch=0,
            grid=grid,
            in_specs=[
                pl.BlockSpec((tile_b, D), lambda i: (i, 0)),   # A tile
                pl.BlockSpec((tile_b, D), lambda i: (i, 0)),   # B tile
            ],
            out_specs=pl.BlockSpec((tile_b, D), lambda i: (i, 0)),
        ),
        compiler_params=pltpu.CompilerParams(
            dimension_semantics=("parallel",),
            vmem_limit_bytes=vmem_limit,
        ),
        cost_estimate=pl.CostEstimate(
            flops=10 * B * D,
            transcendentals=B,
            bytes_accessed=3 * B * D * itemsize,
        ),
    )(feature_a, feature_b)

    return out if orig_D == D else out[:, :orig_D]


def _reference(A, B):
    # Pure-JAX mirror of the PyTorch forward (full NxN matrix, then diagonal).
    dot = jnp.einsum('jd,id->ij', A, B)                       # dot[i, j] = A_j . B_i
    scale = (jnp.linalg.norm(A, axis=1)[None, :]
             * jnp.linalg.norm(B, axis=1)[:, None])
    scale = jnp.maximum(scale, 1e-8)
    sim = 1.0 - dot / scale
    w = jnp.diag(sim)[:, None]                                # (N, 1)
    return (w * A + (2.0 - w) * B) / 2.0


if __name__ == "__main__":
    key = jax.random.PRNGKey(0)
    k1, k2 = jax.random.split(key, 2)

    # Small demo shapes: batch not a multiple of 8 (exercises the ragged last
    # block), feature dim a multiple of 128 (lane-dense, copy-free fast path).
    N, D = 20, 256

    A = jax.random.normal(k1, (N, D), dtype=jnp.float32)
    B = jax.random.normal(k2, (N, D), dtype=jnp.float32)

    out = attention_fusion4(A, B)
    out = jax.block_until_ready(out)

    ref = _reference(A, B)
    assert out.shape == (N, D)
    assert jnp.allclose(out, ref, atol=1e-5, rtol=1e-5), "mismatch vs reference"

    print("KERNEL_OK")
</pallas_src>

<mosaic_0001>
module attributes {stable_mosaic.version = 11 : i64} {
  func.func @_attention_fusion4_kernel(%arg0: i32, %arg1: memref<8x256xf32, #tpu.memory_space<vmem>>, %arg2: memref<8x256xf32, #tpu.memory_space<vmem>>, %arg3: memref<8x256xf32, #tpu.memory_space<vmem>>) attributes {dimension_semantics = [#tpu.dimension_semantics<parallel>], iteration_bounds = array<i64: 3>, scalar_prefetch = 0 : i64, scratch_operands = 0 : i64, tpu.core_type = #tpu.core_type<tc>, window_params = [{transform_indices = @transform_0, window_bounds = array<i64: 8, 256>}, {transform_indices = @transform_1, window_bounds = array<i64: 8, 256>}, {transform_indices = @transform_2, window_bounds = array<i64: 8, 256>}]} {
    %c0 = arith.constant 0 : index
    %c0_0 = arith.constant 0 : index
    %0 = vector.load %arg1[%c0, %c0_0] : memref<8x256xf32, #tpu.memory_space<vmem>>, vector<8x256xf32>
    %c0_1 = arith.constant 0 : index
    %c0_2 = arith.constant 0 : index
    %1 = vector.load %arg2[%c0_1, %c0_2] : memref<8x256xf32, #tpu.memory_space<vmem>>, vector<8x256xf32>
    %2 = arith.mulf %0, %1 : vector<8x256xf32>
    %cst = arith.constant dense<0.000000e+00> : vector<8xf32>
    %3 = vector.multi_reduction <add>, %2, %cst [1] : vector<8x256xf32> to vector<8xf32>
    %4 = vector.shape_cast %3 : vector<8xf32> to vector<8x1xf32>
    %5 = arith.mulf %0, %0 : vector<8x256xf32>
    %cst_3 = arith.constant dense<0.000000e+00> : vector<8xf32>
    %6 = vector.multi_reduction <add>, %5, %cst_3 [1] : vector<8x256xf32> to vector<8xf32>
    %7 = vector.shape_cast %6 : vector<8xf32> to vector<8x1xf32>
    %8 = arith.mulf %1, %1 : vector<8x256xf32>
    %cst_4 = arith.constant dense<0.000000e+00> : vector<8xf32>
    %9 = vector.multi_reduction <add>, %8, %cst_4 [1] : vector<8x256xf32> to vector<8xf32>
    %10 = vector.shape_cast %9 : vector<8xf32> to vector<8x1xf32>
    %11 = arith.mulf %7, %10 : vector<8x1xf32>
    %cst_5 = arith.constant 1.000000e-16 : f32
    %12 = vector.broadcast %cst_5 : f32 to vector<8x1xf32>
    %13 = arith.maximumf %11, %12 : vector<8x1xf32>
    %14 = math.rsqrt %13 : vector<8x1xf32>
    %15 = arith.mulf %4, %14 : vector<8x1xf32>
    %cst_6 = arith.constant 1.000000e+00 : f32
    %16 = vector.broadcast %cst_6 : f32 to vector<8x1xf32>
    %17 = arith.subf %16, %15 : vector<8x1xf32>
    %18 = vector.broadcast %17 : vector<8x1xf32> to vector<8x256xf32>
    %19 = arith.mulf %18, %0 : vector<8x256xf32>
    %cst_7 = arith.constant 2.000000e+00 : f32
    %20 = vector.broadcast %cst_7 : f32 to vector<8x1xf32>
    %21 = arith.subf %20, %17 : vector<8x1xf32>
    %22 = vector.broadcast %21 : vector<8x1xf32> to vector<8x256xf32>
    %23 = arith.mulf %22, %1 : vector<8x256xf32>
    %24 = arith.addf %19, %23 : vector<8x256xf32>
    %cst_8 = arith.constant 5.000000e-01 : f32
    %25 = vector.broadcast %cst_8 : f32 to vector<8x256xf32>
    %26 = arith.mulf %25, %24 : vector<8x256xf32>
    %c0_9 = arith.constant 0 : index
    %c0_10 = arith.constant 0 : index
    %27 = vector.load %arg3[%c0_9, %c0_10] : memref<8x256xf32, #tpu.memory_space<vmem>>, vector<8x256xf32>
    tpu.vector_store %arg3[%c0_9, %c0_10], %26 {strides = array<i32>} : memref<8x256xf32, #tpu.memory_space<vmem>>, vector<8x256xf32>,
    return
  }
  func.func @transform_0(%arg0: i32) -> (i32, i32) {
    %c0_i32 = arith.constant 0 : i32
    %c0_i32_0 = arith.constant 0 : i32
    return %arg0, %c0_i32 : i32, i32
  }
  func.func @transform_1(%arg0: i32) -> (i32, i32) {
    %c0_i32 = arith.constant 0 : i32
    %c0_i32_0 = arith.constant 0 : i32
    return %arg0, %c0_i32 : i32, i32
  }
  func.func @transform_2(%arg0: i32) -> (i32, i32) {
    %c0_i32 = arith.constant 0 : i32
    %c0_i32_0 = arith.constant 0 : i32
    return %arg0, %c0_i32 : i32, i32
  }
}

</mosaic_0001>

<llo_original>
// kernel: attention_fusion4.1
$region0: #{attention_fusion4.1}
  #allocation0 [shape = 'u32[]', space=smem, size = 0x4, offset = 0x4, fixed_abs, tag = 'smem constant byte address 0x4 - core index']
  #allocation1 [shape = 'u32[144,128]{1,0:T(1,128)}', space=vmem, size = 0x12000, scoped, tag = 'internal scratch']
  %s0 = inlined_call_operand.hbm [shape: f32[20,256], index: 0, kind: input, shape index: {}]
  %s1 = inlined_call_operand.hbm [shape: f32[20,256], index: 1, kind: input, shape index: {}]
  %s2 = inlined_call_operand.hbm [shape: f32[20,256], index: 2, kind: output, shape index: {}]
  %s3 = sld [smem:[#allocation0]]
  $region49: #{attention_fusion4.1} parent=0
    _
  %s5 = ssub.s32 1, %s3
  %s6 = scalar_select 0, %s5, %s3
  $region1: #{attention_fusion4.1} parent=0
    #allocation2 [shape = 'u8[16384]{0}', space=vmem, size = 0x4000, scoped, tag = 'input window, operand 0']
    #allocation3 [shape = 's32[2]{0}', space=sflag, size = 0x8, scoped, tag = 'scoped memory for attention_fusion4.1']
    #allocation4 [shape = 's32[2]{0}', space=sflag, size = 0x8, scoped, tag = 'scoped memory for attention_fusion4.1']
    #allocation5 [shape = 'u8[16384]{0}', space=vmem, size = 0x4000, scoped, tag = 'input window, operand 1']
    #allocation6 [shape = 's32[2]{0}', space=sflag, size = 0x8, scoped, tag = 'scoped memory for attention_fusion4.1']
    #allocation7 [shape = 'u8[16384]{0}', space=vmem, size = 0x4000, scoped, tag = 'output window, operand 0']
    %7 = vsyncpa [#allocation3], 0
    %s8 = scalar_lea.sflag [#allocation3], 1
    %9 = vsyncpa %s8, 0
    %10 = vsyncpa [#allocation6], 0
    %s11 = scalar_lea.sflag [#allocation6], 1
    %12 = vsyncpa %s11, 0
    %13 = vsyncpa [#allocation4], 0
    %s14 = scalar_lea.sflag [#allocation4], 1
    %15 = vsyncpa %s14, 0
    loop: start=0, step=1, limit=5
    $region2: #{attention_fusion4.1} parent=1 // loop_pre_header
      _
    $region3: #{attention_fusion4.1} parent=1 // loop_header
      %s17 = sphi 0, %s21
      %p18 = scmp.ge.s32.totalorder %s17, 5
      %s27 = sphi 0, %s29
      %s30 = sphi 0, %s27
      %s31 = sphi 0, %s30
      %s47 = sphi 0, %s31
      %s53 = sphi 0, %s55
      %s56 = sphi 0, %s53
      %s57 = sphi 0, %s56
      %s73 = sphi 0, %s57
      %s79 = sphi 0, %s81
      %s82 = sphi 0, %s79
      %s83 = sphi 0, %s82
      %s99 = sphi 0, %s83
    $region4: #{attention_fusion4.1} parent=1 // loop_header_branch
      %20 = sbr.rel (%p18) target = $region8
    $region5: #{attention_fusion4.1} parent=1 // loop_body
      %s22 = ssub.s32 %s17, 1
      %s23 = ssub.s32 %s17, 2
      %s24 = sadd.s32 %s17, 1
      %s25 = ssub.s32 %s17, %s24
      %p26 = scmp.eq.s32.totalorder %s25, 0
      %s28 = sadd.s32 %s27, 1
      %s29 = scalar_select %p26, %s27, %s28
      %p32 = pneg %p26
      %p33 = scmp.eq.s32.totalorder %s17, 2
      %p34 = por %p32, %p33
      %p35 = scmp.ne.s32.totalorder %s27, %s30
      %p36 = scmp.eq.s32.totalorder %s17, 0
      %p37 = por %p35, %p36
      %p38 = scmp.ne.s32.totalorder %s27, %s30
      %p39 = scmp.eq.s32.totalorder %s22, 2
      %p40 = por %p38, %p39
      %p41 = scmp.ne.s32.totalorder %s30, %s31
      %p42 = scmp.eq.s32.totalorder %s22, 0
      %p43 = por %p41, %p42
      %p44 = scmp.ne.s32.totalorder %s30, %s31
      %p45 = scmp.eq.s32.totalorder %s23, 2
      %p46 = por %p44, %p45
      %p48 = scmp.ne.s32.totalorder %s31, %s47
      %p49 = scmp.eq.s32.totalorder %s23, 0
      %p50 = por %p48, %p49
      %s51 = ssub.s32 %s17, %s24
      %p52 = scmp.eq.s32.totalorder %s51, 0
      %s54 = sadd.s32 %s53, 1
      %s55 = scalar_select %p52, %s53, %s54
      %p58 = pneg %p52
      %p59 = scmp.eq.s32.totalorder %s17, 2
      %p60 = por %p58, %p59
      %p61 = scmp.ne.s32.totalorder %s53, %s56
      %p62 = scmp.eq.s32.totalorder %s17, 0
      %p63 = por %p61, %p62
      %p64 = scmp.ne.s32.totalorder %s53, %s56
      %p65 = scmp.eq.s32.totalorder %s22, 2
      %p66 = por %p64, %p65
      %p67 = scmp.ne.s32.totalorder %s56, %s57
      %p68 = scmp.eq.s32.totalorder %s22, 0
      %p69 = por %p67, %p68
      %p70 = scmp.ne.s32.totalorder %s56, %s57
      %p71 = scmp.eq.s32.totalorder %s23, 2
      %p72 = por %p70, %p71
      %p74 = scmp.ne.s32.totalorder %s57, %s73
      %p75 = scmp.eq.s32.totalorder %s23, 0
      %p76 = por %p74, %p75
      %s77 = ssub.s32 %s17, %s24
      %p78 = scmp.eq.s32.totalorder %s77, 0
      %s80 = sadd.s32 %s79, 1
      %s81 = scalar_select %p78, %s79, %s80
      %p84 = pneg %p78
      %p85 = scmp.eq.s32.totalorder %s17, 2
      %p86 = por %p84, %p85
      %p87 = scmp.ne.s32.totalorder %s79, %s82
      %p88 = scmp.eq.s32.totalorder %s17, 0
      %p89 = por %p87, %p88
      %p90 = scmp.ne.s32.totalorder %s79, %s82
      %p91 = scmp.eq.s32.totalorder %s22, 2
      %p92 = por %p90, %p91
      %p93 = scmp.ne.s32.totalorder %s82, %s83
      %p94 = scmp.eq.s32.totalorder %s22, 0
      %p95 = por %p93, %p94
      %p96 = scmp.ne.s32.totalorder %s82, %s83
      %p97 = scmp.eq.s32.totalorder %s23, 2
      %p98 = por %p96, %p97
      %p100 = scmp.ne.s32.totalorder %s83, %s99
      %p101 = scmp.eq.s32.totalorder %s23, 0
      %p102 = por %p100, %p101
      %p103 = scmp.le.s32.totalorder 1, %s17
      %p104 = scmp.lt.s32.totalorder %s17, 4
      %p105 = pnand %p103, %p104
      %p106 = pneg %p105
      // Predicated region
      $region9: #{attention_fusion4.1} parent=5 // pred_check
        _
      $region10: #{attention_fusion4.1} parent=5 // pred_check_branch
        %108 = sbr.rel (%p105) target = $region12
      $region11: #{attention_fusion4.1} parent=5 // pred_region
        %s109 = ssub.s32 %s17, 1
      $region12: #{attention_fusion4.1} parent=5 // pred_fallthru
        _
      %p110 = scmp.lt.s32.totalorder %s17, 3
      // Predicated region
      $region13: #{attention_fusion4.1} parent=5 // pred_check
        %p111 = pneg %p110
      $region14: #{attention_fusion4.1} parent=5 // pred_check_branch
        %113 = sbr.rel (%p111) target = $region16
      $region15: #{attention_fusion4.1} parent=5 // pred_region
        // Predicated region
        $region17: #{attention_fusion4.1} parent=15 // pred_check
          %p114 = pneg %p37
        $region18: #{attention_fusion4.1} parent=15 // pred_check_branch
          %116 = sbr.rel (%p114) target = $region20
        $region19: #{attention_fusion4.1} parent=15 // pred_region
          %s117 = sand.u32 %s27, 1
          %s118 = scalar_lea.sflag [#allocation3], %s117
          %s119 = sand.u32 %s27, 1
          %s120 = smul.addr %s119, 16
          %s121 = scalar_lea.vmem [#allocation2], %s120
          %s123 = ssub.s32 256, 256
          %124 = vsyncadd %s118, %s123
          %s125 = smul.addr %s17, 2
          %s126 = smul.addr %s125, 128
          %s127 = scalar_lea.hbm %s0, %s126
          %s129 = sshll.u32 %s121, 4
          %s130 = int_to_ptr.vmem [resolvable:$true] %s129
          %132 = dma.hbm_to_vmem [thread:$0]  %s127, 256, %s130, %s118
        $region20: #{attention_fusion4.1} parent=15 // pred_fallthru
          _
        // Predicated region
        $region21: #{attention_fusion4.1} parent=15 // pred_check
          %p133 = pneg %p63
        $region22: #{attention_fusion4.1} parent=15 // pred_check_branch
          %135 = sbr.rel (%p133) target = $region24
        $region23: #{attention_fusion4.1} parent=15 // pred_region
          %s136 = sand.u32 %s53, 1
          %s137 = scalar_lea.sflag [#allocation6], %s136
          %s138 = sand.u32 %s53, 1
          %s139 = smul.addr %s138, 16
          %s140 = scalar_lea.vmem [#allocation5], %s139
          %s142 = ssub.s32 256, 256
          %143 = vsyncadd %s137, %s142
          %s144 = smul.addr %s17, 2
          %s145 = smul.addr %s144, 128
          %s146 = scalar_lea.hbm %s1, %s145
          %s148 = sshll.u32 %s140, 4
          %s149 = int_to_ptr.vmem [resolvable:$true] %s148
          %151 = dma.hbm_to_vmem [thread:$0]  %s146, 256, %s149, %s137
        $region24: #{attention_fusion4.1} parent=15 // pred_fallthru
          _
      $region16: #{attention_fusion4.1} parent=5 // pred_fallthru
        _
      %p152 = scmp.le.s32.totalorder 1, %s17
      %p153 = scmp.lt.s32.totalorder %s17, 4
      %p154 = pnand %p152, %p153
      %p155 = pneg %p154
      // Predicated region
      $region25: #{attention_fusion4.1} parent=5 // pred_check
        _
      $region26: #{attention_fusion4.1} parent=5 // pred_check_branch
        %157 = sbr.rel (%p154) target = $region28
      $region27: #{attention_fusion4.1} parent=5 // pred_region
        %s158 = ssub.s32 %s17, 1
        %s159 = sand.u32 %s30, 1
        %s160 = scalar_lea.sflag [#allocation3], %s159
        %s161 = sand.u32 %s30, 1
        %s162 = smul.addr %s161, 16
        %s163 = scalar_lea.vmem [#allocation2], %s162
        // Predicated region
        $region29: #{attention_fusion4.1} parent=27 // pred_check
          %p164 = pneg %p43
        $region30: #{attention_fusion4.1} parent=27 // pred_check_branch
          %166 = sbr.rel (%p164) target = $region32
        $region31: #{attention_fusion4.1} parent=27 // pred_region
          %167 = dma.done %s160, 256
        $region32: #{attention_fusion4.1} parent=27 // pred_fallthru
          _
        %s168 = sand.u32 %s56, 1
        %s169 = scalar_lea.sflag [#allocation6], %s168
        %s170 = sand.u32 %s56, 1
        %s171 = smul.addr %s170, 16
        %s172 = scalar_lea.vmem [#allocation5], %s171
        // Predicated region
        $region33: #{attention_fusion4.1} parent=27 // pred_check
          %p173 = pneg %p69
        $region34: #{attention_fusion4.1} parent=27 // pred_check_branch
          %175 = sbr.rel (%p173) target = $region36
        $region35: #{attention_fusion4.1} parent=27 // pred_region
          %176 = dma.done %s169, 256
        $region36: #{attention_fusion4.1} parent=27 // pred_fallthru
          _
        %s177 = sand.u32 %s30, 1
        %s178 = scalar_lea.sflag [#allocation3], %s177
        %s179 = sand.u32 %s30, 1
        %s180 = smul.addr %s179, 16
        %s181 = scalar_lea.vmem [#allocation2], %s180
        %p182 = pneg %p43
        %p183 = pneg %p40
        %s184 = sand.u32 %s56, 1
        %s185 = scalar_lea.sflag [#allocation6], %s184
        %s186 = sand.u32 %s56, 1
        %s187 = smul.addr %s186, 16
        %s188 = scalar_lea.vmem [#allocation5], %s187
        %p189 = pneg %p69
        %p190 = pneg %p66
        %p191 = pneg %p95
        %p192 = pneg %p92
        %s193 = sand.u32 %s82, 1
        %s194 = scalar_lea.sflag [#allocation4], %s193
        %s195 = sand.u32 %s82, 1
        %s196 = smul.addr %s195, 16
        %s197 = scalar_lea.vmem [#allocation7], %s196
        %v198 = vld [vmem:[%s163] sm:$0xff]
        %v199 = vld [vmem:[%s163 + $0x8] sm:$0xff]
        %v200 = vld [vmem:[%s172] sm:$0xff]
        %v201 = vld [vmem:[%s172 + $0x8] sm:$0xff]
        %v202 = vmul.f32 %v198, %v200
        %v203 = vmul.f32 %v199, %v201
        %v204 = vadd.f32 %v202, %v203
        %205 = vadd.xlane.f32.xlu0 %v204
        %v206 = vpop.xlane.xlu0 %205
        %v207 = vmul.f32 %v198, %v198
        %v208 = vmul.f32 %v199, %v199
        %v209 = vadd.f32 %v207, %v208
        %210 = vadd.xlane.f32.xlu0 %v209
        %v211 = vpop.xlane.xlu0 %210
        %v212 = vmul.f32 %v200, %v200
        %v213 = vmul.f32 %v201, %v201
        %v214 = vadd.f32 %v212, %v213
        %215 = vadd.xlane.f32.xlu0 %v214
        %v216 = vpop.xlane.xlu0 %215
        %v217 = vmul.f32 %v211, %v216
        %v218 = vmax.f32 %v217, 1e-16
        %v219 = vrsqrt.pop %v218
        %v220 = vmul.f32 %v206, %v219
        %v221 = vsub.f32 1.0, %v220
        %v222 = vmul.f32 %v221, %v198
        %v223 = vmul.f32 %v221, %v199
        %v224 = vsub.f32 2.0, %v221
        %v225 = vmul.f32 %v224, %v200
        %v226 = vmul.f32 %v224, %v201
        %v227 = vadd.f32 %v222, %v225
        %v228 = vadd.f32 %v223, %v226
        %v229 = vmul.f32 %v227, 0.5
        %v230 = vmul.f32 %v228, 0.5
        %231 = vst [vmem:[%s197] sm:$0xff] %v229
        %232 = vst [vmem:[%s197 + $0x8] sm:$0xff] %v230
        %s233 = sand.u32 %s82, 1
        %s234 = scalar_lea.sflag [#allocation4], %s233
        %s235 = sand.u32 %s82, 1
        %s236 = smul.addr %s235, 16
        %s237 = scalar_lea.vmem [#allocation7], %s236
        // Predicated region
        $region37: #{attention_fusion4.1} parent=27 // pred_check
          %p238 = pneg %p92
        $region38: #{attention_fusion4.1} parent=27 // pred_check_branch
          %240 = sbr.rel (%p238) target = $region40
        $region39: #{attention_fusion4.1} parent=27 // pred_region
          %s242 = ssub.s32 256, 256
          %243 = vsyncadd %s234, %s242
          %s244 = smul.addr %s22, 2
          %s245 = smul.addr %s244, 128
          %s246 = scalar_lea.hbm %s2, %s245
          %s248 = sshll.u32 %s237, 4
          %s249 = int_to_ptr.vmem [resolvable:$true] %s248
          %251 = dma.vmem_to_hbm [thread:$0]  %s249, 256, %s246, %s234
        $region40: #{attention_fusion4.1} parent=27 // pred_fallthru
          _
      $region28: #{attention_fusion4.1} parent=5 // pred_fallthru
        _
      %p252 = scmp.le.s32.totalorder 2, %s17
      // Predicated region
      $region41: #{attention_fusion4.1} parent=5 // pred_check
        %p253 = pneg %p252
      $region42: #{attention_fusion4.1} parent=5 // pred_check_branch
        %255 = sbr.rel (%p253) target = $region44
      $region43: #{attention_fusion4.1} parent=5 // pred_region
        %s256 = ssub.s32 %s17, 2
        // Predicated region
        $region45: #{attention_fusion4.1} parent=43 // pred_check
          %p257 = pneg %p98
        $region46: #{attention_fusion4.1} parent=43 // pred_check_branch
          %259 = sbr.rel (%p257) target = $region48
        $region47: #{attention_fusion4.1} parent=43 // pred_region
          %s260 = sand.u32 %s83, 1
          %s261 = scalar_lea.sflag [#allocation4], %s260
          %s262 = sand.u32 %s83, 1
          %s263 = smul.addr %s262, 16
          %s264 = scalar_lea.vmem [#allocation7], %s263
          %265 = dma.done %s261, 256
        $region48: #{attention_fusion4.1} parent=43 // pred_fallthru
          _
      $region44: #{attention_fusion4.1} parent=5 // pred_fallthru
        _
    $region6: #{attention_fusion4.1} parent=1 // loop_footer
      %s21 = sadd.s32 1, %s17
    $region7: #{attention_fusion4.1} parent=1 // loop_footer_branch
      %16 = sbr.rel target = $region3
    $region8: #{attention_fusion4.1} parent=1 // loop_exit
      _
    %266 = vsyncpa [#allocation3], 1
    %s267 = scalar_lea.sflag [#allocation3], 1
    %268 = vsyncpa %s267, 1
    %269 = vsyncpa [#allocation6], 1
    %s270 = scalar_lea.sflag [#allocation6], 1
    %271 = vsyncpa %s270, 1
    %272 = vsyncpa [#allocation4], 1
    %s273 = scalar_lea.sflag [#allocation4], 1
    %274 = vsyncpa %s273, 1

</llo_original>
